<compile_context>
chip_gen: v7x
topology: tpu7x:2x2x1
jax: 0.10.0
libtpu: 0.0.40
codegen_flags: <defaults>
</compile_context>

<pallas_src>
import functools

import jax
import jax.numpy as jnp
from jax.experimental import pallas as pl
from jax.experimental.pallas import tpu as pltpu


def patch_embed_kernel(x_ref, w_ref, add_ref, o_ref):
    # x_ref:   (TN, K)  flattened-patch tile (one batch element, TN patches)
    # w_ref:   (K, E)   full projection weight (VMEM-resident for all steps)
    # add_ref: (TN, E)  fused bias + positional embedding (resident across batch)
    # o_ref:   (TN, E)
    acc = jnp.dot(x_ref[...], w_ref[...], preferred_element_type=jnp.float32)
    o_ref[...] = (acc + add_ref[...]).astype(o_ref.dtype)


def patchify(x, patch_size):
    """NCHW -> (B, N, C*p*p), matching torch
    unfold(2,p,p).unfold(3,p,p).permute(0,2,3,1,4,5).reshape(B,-1,C*p*p)."""
    B, C, H, W = x.shape
    p = patch_size
    x = x.reshape(B, C, H // p, p, W // p, p)
    x = x.transpose(0, 2, 4, 1, 3, 5)          # (B, H/p, W/p, C, p, p)
    return x.reshape(B, (H // p) * (W // p), C * p * p)


def _round_up(x, m):
    return (x + m - 1) // m * m


def _sublane_align(*dtypes):
    """Sublane alignment for the row axis: 8 for f32, 16 for bf16, 32 for 1B."""
    align = 8
    for dt in dtypes:
        align = max(align, 32 // jnp.dtype(dt).itemsize)
    return align


def _pick_row_tile(n, align, cap, fixed_bytes, per_row_bytes, budget):
    """Largest divisor of n that is a multiple of `align`, <= cap, and whose
    (double-buffered) VMEM footprint fits `budget`.  Falls back to the full
    dim (a block equal to the array dim is always legal)."""
    cands = [t for t in range(align, min(n, cap) + 1, align) if n % t == 0]
    if not cands:
        return n
    cands.sort(reverse=True)
    for t in cands:
        if fixed_bytes + t * per_row_bytes <= budget:
            return t
    return cands[-1]


@functools.partial(jax.jit, static_argnames=("patch_size", "matmul_dtype"))
def patch_embedding(x_nchw, w, b, pos_embed, *, patch_size, matmul_dtype=None):
    """Forward pass of PatchEmbedding.

    x_nchw:    (B, C, H, W)
    w:         (E, K) torch-style nn.Linear weight, K = C*p*p
    b:         (E,)
    pos_embed: (1, N, E)
    matmul_dtype: optional dtype (e.g. jnp.bfloat16) for the MXU operands.
    returns    (B, N, E) in x_nchw.dtype
    """
    B, C, H, W = x_nchw.shape
    assert H == W, "Image must be square"
    assert H % patch_size == 0, "Image size must be divisible by patch size"

    out_dtype = x_nchw.dtype

    x_patches = patchify(x_nchw, patch_size)   # (B, N, K)
    N, K = x_patches.shape[1], x_patches.shape[2]
    E = w.shape[0]

    w_t = jnp.transpose(w)                     # (K, E)
    if matmul_dtype is not None:
        x_patches = x_patches.astype(matmul_dtype)
        w_t = w_t.astype(matmul_dtype)

    # Fold the bias into the positional embedding once (one fewer kernel input,
    # no in-kernel broadcast).  Kept in f32 so the add happens at accumulator
    # precision.
    add = (pos_embed.astype(jnp.float32) + b.astype(jnp.float32)[None, None, :])[0]  # (N, E)

    # --- VMEM footprint accounting (lane/sublane-padded, double-buffered) ----
    xb = jnp.dtype(x_patches.dtype).itemsize
    wb = jnp.dtype(w_t.dtype).itemsize
    ob = jnp.dtype(out_dtype).itemsize
    K_pad = _round_up(K, 128)
    E_pad = _round_up(E, 128)
    w_bytes = _round_up(K, 8) * E_pad * wb
    per_row_bytes = K_pad * xb + E_pad * 4 + E_pad * ob   # x + add + out, per patch row
    budget = 40 * 1024 * 1024                             # v7x-safe (64 MiB physical)

    align = _sublane_align(x_patches.dtype, out_dtype)
    TN = _pick_row_tile(N, align, 512, 2 * w_bytes, 2 * per_row_bytes, budget)

    footprint = 2 * (w_bytes + _round_up(TN, 8) * per_row_bytes)
    vmem_limit = int(min(48 * 1024 * 1024,
                         max(footprint + 8 * 1024 * 1024, 16 * 1024 * 1024)))

    grid = (N // TN, B)   # batch innermost -> W / add buffers are not re-fetched per b

    out = pl.pallas_call(
        patch_embed_kernel,
        out_shape=jax.ShapeDtypeStruct((B, N, E), out_dtype),
        grid_spec=pltpu.PrefetchScalarGridSpec(
            num_scalar_prefetch=0,
            grid=grid,
            in_specs=[
                # X tile: one batch element, TN patches, full K.
                pl.BlockSpec((None, TN, K), lambda ni, bi: (bi, ni, 0)),
                # Full weight: index_map is constant -> fetched once, VMEM-resident.
                pl.BlockSpec((K, E), lambda ni, bi: (0, 0)),
                # Fused bias + pos_embed: constant across the inner batch loop.
                pl.BlockSpec((TN, E), lambda ni, bi: (ni, 0)),
            ],
            out_specs=pl.BlockSpec((None, TN, E), lambda ni, bi: (bi, ni, 0)),
        ),
        compiler_params=pltpu.CompilerParams(
            # No reduction axis -> everything parallel (megacore split on the
            # long batch/row axes for v7x's two TensorCores).
            dimension_semantics=("parallel", "parallel"),
            vmem_limit_bytes=vmem_limit,
        ),
    )(x_patches, w_t, add)

    return out


if __name__ == "__main__":
    # Small shapes consistent with the module:
    #   img_size=16, patch_size=4, in_channels=4, embed_dim=32, batch=2
    img_size = 16
    patch_size = 4
    in_channels = 4
    embed_dim = 32
    batch = 2

    num_patches = (img_size // patch_size) ** 2            # 16
    K = in_channels * patch_size * patch_size               # 64

    key = jax.random.PRNGKey(0)
    k_x, k_w, k_b, k_pos = jax.random.split(key, 4)

    x = jax.random.normal(k_x, (batch, in_channels, img_size, img_size),
                          dtype=jnp.float32)

    # nn.Linear(K, E) default init: U(-1/sqrt(K), 1/sqrt(K)) for weight & bias
    bound = 1.0 / (K ** 0.5)
    w = jax.random.uniform(k_w, (embed_dim, K), minval=-bound, maxval=bound,
                           dtype=jnp.float32)
    b = jax.random.uniform(k_b, (embed_dim,), minval=-bound, maxval=bound,
                           dtype=jnp.float32)
    # torch.rand -> U[0, 1)
    pos_embed = jax.random.uniform(k_pos, (1, num_patches, embed_dim),
                                   dtype=jnp.float32)

    # Reference in plain JAX (same semantics as the torch forward).
    ref = jnp.einsum("bnk,ek->bne", patchify(x, patch_size), w,
                     precision=jax.lax.Precision.HIGHEST) + b + pos_embed

    # f32 path (default).
    out = patch_embedding(x, w, b, pos_embed, patch_size=patch_size)
    out = jax.block_until_ready(out)
    assert out.shape == (batch, num_patches, embed_dim)
    assert jnp.allclose(out, ref, atol=5e-3, rtol=5e-3), \
        float(jnp.max(jnp.abs(out - ref)))

    # bf16-matmul path (the v6e/v7x MXU-native option); looser tolerance.
    out_bf16 = patch_embedding(x, w, b, pos_embed, patch_size=patch_size,
                               matmul_dtype=jnp.bfloat16)
    out_bf16 = jax.block_until_ready(out_bf16)
    assert out_bf16.shape == (batch, num_patches, embed_dim)
    assert jnp.allclose(out_bf16, ref, atol=5e-2, rtol=5e-2), \
        float(jnp.max(jnp.abs(out_bf16 - ref)))

    print("KERNEL_OK")
</pallas_src>

<mosaic_0001>
module attributes {stable_mosaic.version = 11 : i64} {
  func.func @patch_embed_kernel(%arg0: i32, %arg1: i32, %arg2: memref<1x16x64xf32, #tpu.memory_space<vmem>>, %arg3: memref<64x32xf32, #tpu.memory_space<vmem>>, %arg4: memref<16x32xf32, #tpu.memory_space<vmem>>, %arg5: memref<1x16x32xf32, #tpu.memory_space<vmem>>) attributes {dimension_semantics = [#tpu.dimension_semantics<parallel>, #tpu.dimension_semantics<parallel>], iteration_bounds = array<i64: 1, 2>, scalar_prefetch = 0 : i64, scratch_operands = 0 : i64, tpu.core_type = #tpu.core_type<tc>, window_params = [{transform_indices = @transform_0, window_bounds = array<i64: 1, 16, 64>}, {pipeline_mode = #tpu.pipeline_mode<synchronous>, transform_indices = @transform_1, window_bounds = array<i64: 64, 32>}, {transform_indices = @transform_2, window_bounds = array<i64: 16, 32>}, {transform_indices = @transform_3, window_bounds = array<i64: 1, 16, 32>}]} {
    %c0 = arith.constant 0 : index
    %c0_0 = arith.constant 0 : index
    %c0_1 = arith.constant 0 : index
    %0 = vector.load %arg2[%c0, %c0_0, %c0_1] : memref<1x16x64xf32, #tpu.memory_space<vmem>>, vector<1x16x64xf32>
    %1 = vector.shape_cast %0 : vector<1x16x64xf32> to vector<16x64xf32>
    %c0_2 = arith.constant 0 : index
    %c0_3 = arith.constant 0 : index
    %2 = vector.load %arg3[%c0_2, %c0_3] : memref<64x32xf32, #tpu.memory_space<vmem>>, vector<64x32xf32>
    %cst = arith.constant dense<0.000000e+00> : vector<16x32xf32>
    %3 = tpu.matmul %1, %2, %cst {dimension_numbers = #tpu.dot_dimension_numbers<[1], [0], [0], [1], [0, 0, 1, 1], [], []>} : vector<16x64xf32>, vector<64x32xf32>, vector<16x32xf32> -> vector<16x32xf32>
    %c0_4 = arith.constant 0 : index
    %c0_5 = arith.constant 0 : index
    %4 = vector.load %arg4[%c0_4, %c0_5] : memref<16x32xf32, #tpu.memory_space<vmem>>, vector<16x32xf32>
    %5 = arith.addf %3, %4 : vector<16x32xf32>
    %c0_6 = arith.constant 0 : index
    %c0_7 = arith.constant 0 : index
    %c0_8 = arith.constant 0 : index
    %6 = vector.load %arg5[%c0_6, %c0_7, %c0_8] : memref<1x16x32xf32, #tpu.memory_space<vmem>>, vector<1x16x32xf32>
    %7 = vector.shape_cast %6 : vector<1x16x32xf32> to vector<16x32xf32>
    %8 = vector.shape_cast %5 : vector<16x32xf32> to vector<1x16x32xf32>
    tpu.vector_store %arg5[%c0_6, %c0_7, %c0_8], %8 {strides = array<i32>} : memref<1x16x32xf32, #tpu.memory_space<vmem>>, vector<1x16x32xf32>,
    return
  }
  func.func @transform_0(%arg0: i32, %arg1: i32) -> (i32, i32, i32) {
    %c0_i32 = arith.constant 0 : i32
    %c0_i32_0 = arith.constant 0 : i32
    return %arg1, %arg0, %c0_i32 : i32, i32, i32
  }
  func.func @transform_1(%arg0: i32, %arg1: i32) -> (i32, i32) {
    %c0_i32 = arith.constant 0 : i32
    %c0_i32_0 = arith.constant 0 : i32
    %c0_i32_1 = arith.constant 0 : i32
    return %c0_i32, %c0_i32_0 : i32, i32
  }
  func.func @transform_2(%arg0: i32, %arg1: i32) -> (i32, i32) {
    %c0_i32 = arith.constant 0 : i32
    %c0_i32_0 = arith.constant 0 : i32
    return %arg0, %c0_i32 : i32, i32
  }
  func.func @transform_3(%arg0: i32, %arg1: i32) -> (i32, i32, i32) {
    %c0_i32 = arith.constant 0 : i32
    %c0_i32_0 = arith.constant 0 : i32
    return %arg1, %arg0, %c0_i32 : i32, i32, i32
  }
}

</mosaic_0001>

<llo_original>
// kernel: patch_embedding.1
$region0: #{patch_embedding.1}
  #allocation0 [shape = 'u32[]', space=smem, size = 0x4, offset = 0x4, fixed_abs, tag = 'smem constant byte address 0x4 - core index']
  #allocation1 [shape = 'u32[144,128]{1,0:T(1,128)}', space=vmem, size = 0x12000, scoped, tag = 'internal scratch']
  %s0 = inlined_call_operand.vmem [shape: f32[2,16,64], index: 0, kind: input, shape index: {}]
  %s1 = inlined_call_operand.vmem [shape: f32[64,32], index: 1, kind: input, shape index: {}]
  %s2 = inlined_call_operand.vmem [shape: f32[16,32], index: 2, kind: input, shape index: {}]
  %s3 = inlined_call_operand.hbm [shape: f32[2,16,32], index: 3, kind: output, shape index: {}]
  %s4 = sld [smem:[#allocation0]]
  $region45: #{patch_embedding.1} parent=0
    _
  %s6 = ssub.s32 1, %s4
  %s7 = scalar_select 0, %s6, %s4
  $region1: #{patch_embedding.1} parent=0
    #allocation2 [shape = 'u8[16384]{0}', space=vmem, size = 0x4000, scoped, tag = 'output window, operand 0']
    #allocation3 [shape = 's32[2]{0}', space=sflag, size = 0x8, scoped, tag = 'scoped memory for patch_embedding.1']
    %8 = vsyncpa [#allocation3], 0
    %s9 = scalar_lea.sflag [#allocation3], 1
    %10 = vsyncpa %s9, 0
    loop: start=0, step=1, limit=4
    $region2: #{patch_embedding.1} parent=1 // loop_pre_header
      _
    $region3: #{patch_embedding.1} parent=1 // loop_header
      %s12 = sphi 0, %s16
      %p13 = scmp.ge.s32.totalorder %s12, 4
      %s19 = sphi 0, %s31
      %s20 = sphi 0, %s27
      %s21 = sphi 0, %s19
      %s22 = sphi 0, %s20
      %s23 = sphi 0, %s21
      %s24 = sphi 0, %s22
      %s36 = sphi 0, %s38
      %s39 = sphi 0, %s36
      %s40 = sphi 0, %s39
      %s56 = sphi 0, %s40
      %s60 = sphi 0, %s60
      %s62 = sphi 0, %s60
      %s63 = sphi 0, %s62
      %s77 = sphi 0, %s63
      %s83 = sphi 0, %s85
      %s86 = sphi 0, %s83
      %s87 = sphi 0, %s86
      %s103 = sphi 0, %s87
      %s111 = sphi 0, %s113
      %s114 = sphi 0, %s111
      %s115 = sphi 0, %s114
      %s131 = sphi 0, %s115
    $region4: #{patch_embedding.1} parent=1 // loop_header_branch
      %15 = sbr.rel (%p13) target = $region8
    $region5: #{patch_embedding.1} parent=1 // loop_body
      %s17 = ssub.s32 %s12, 1
      %s18 = ssub.s32 %s12, 2
      %s25 = sadd.s32 1, %s20
      %p26 = scmp.ge.s32.totalorder %s25, 2
      %s27 = scalar_select %p26, 0, %s25
      %s28 = sadd.s32 1, %s19
      %s29 = scalar_select %p26, %s28, %s19
      %p30 = scmp.ge.s32.totalorder %s29, 1
      %s31 = scalar_select %p30, 0, %s29
      %s32 = ssub.s32 %s20, %s27
      %s33 = ssub.s32 %s19, %s31
      %s34 = sor.u32 %s32, %s33
      %p35 = scmp.eq.s32.totalorder %s34, 0
      %s37 = sadd.s32 %s36, 1
      %s38 = scalar_select %p35, %s36, %s37
      %p41 = pneg %p35
      %p42 = scmp.eq.s32.totalorder %s12, 1
      %p43 = por %p41, %p42
      %p44 = scmp.ne.s32.totalorder %s36, %s39
      %p45 = scmp.eq.s32.totalorder %s12, 0
      %p46 = por %p44, %p45
      %p47 = scmp.ne.s32.totalorder %s36, %s39
      %p48 = scmp.eq.s32.totalorder %s17, 1
      %p49 = por %p47, %p48
      %p50 = scmp.ne.s32.totalorder %s39, %s40
      %p51 = scmp.eq.s32.totalorder %s17, 0
      %p52 = por %p50, %p51
      %p53 = scmp.ne.s32.totalorder %s39, %s40
      %p54 = scmp.eq.s32.totalorder %s18, 1
      %p55 = por %p53, %p54
      %p57 = scmp.ne.s32.totalorder %s40, %s56
      %p58 = scmp.eq.s32.totalorder %s18, 0
      %p59 = por %p57, %p58
      %s61 = sadd.s32 %s60, 1
      %p64 = scmp.eq.s32.totalorder %s12, 1
      %p65 = scmp.ne.s32.totalorder %s60, %s62
      %p66 = scmp.eq.s32.totalorder %s12, 0
      %p67 = por %p65, %p66
      %p68 = scmp.ne.s32.totalorder %s60, %s62
      %p69 = scmp.eq.s32.totalorder %s17, 1
      %p70 = por %p68, %p69
      %p71 = scmp.ne.s32.totalorder %s62, %s63
      %p72 = scmp.eq.s32.totalorder %s17, 0
      %p73 = por %p71, %p72
      %p74 = scmp.ne.s32.totalorder %s62, %s63
      %p75 = scmp.eq.s32.totalorder %s18, 1
      %p76 = por %p74, %p75
      %p78 = scmp.ne.s32.totalorder %s63, %s77
      %p79 = scmp.eq.s32.totalorder %s18, 0
      %p80 = por %p78, %p79
      %s81 = ssub.s32 %s19, %s31
      %p82 = scmp.eq.s32.totalorder %s81, 0
      %s84 = sadd.s32 %s83, 1
      %s85 = scalar_select %p82, %s83, %s84
      %p88 = pneg %p82
      %p89 = scmp.eq.s32.totalorder %s12, 1
      %p90 = por %p88, %p89
      %p91 = scmp.ne.s32.totalorder %s83, %s86
      %p92 = scmp.eq.s32.totalorder %s12, 0
      %p93 = por %p91, %p92
      %p94 = scmp.ne.s32.totalorder %s83, %s86
      %p95 = scmp.eq.s32.totalorder %s17, 1
      %p96 = por %p94, %p95
      %p97 = scmp.ne.s32.totalorder %s86, %s87
      %p98 = scmp.eq.s32.totalorder %s17, 0
      %p99 = por %p97, %p98
      %p100 = scmp.ne.s32.totalorder %s86, %s87
      %p101 = scmp.eq.s32.totalorder %s18, 1
      %p102 = por %p100, %p101
      %p104 = scmp.ne.s32.totalorder %s87, %s103
      %p105 = scmp.eq.s32.totalorder %s18, 0
      %p106 = por %p104, %p105
      %s107 = ssub.s32 %s20, %s27
      %s108 = ssub.s32 %s19, %s31
      %s109 = sor.u32 %s107, %s108
      %p110 = scmp.eq.s32.totalorder %s109, 0
      %s112 = sadd.s32 %s111, 1
      %s113 = scalar_select %p110, %s111, %s112
      %p116 = pneg %p110
      %p117 = scmp.eq.s32.totalorder %s12, 1
      %p118 = por %p116, %p117
      %p119 = scmp.ne.s32.totalorder %s111, %s114
      %p120 = scmp.eq.s32.totalorder %s12, 0
      %p121 = por %p119, %p120
      %p122 = scmp.ne.s32.totalorder %s111, %s114
      %p123 = scmp.eq.s32.totalorder %s17, 1
      %p124 = por %p122, %p123
      %p125 = scmp.ne.s32.totalorder %s114, %s115
      %p126 = scmp.eq.s32.totalorder %s17, 0
      %p127 = por %p125, %p126
      %p128 = scmp.ne.s32.totalorder %s114, %s115
      %p129 = scmp.eq.s32.totalorder %s18, 1
      %p130 = por %p128, %p129
      %p132 = scmp.ne.s32.totalorder %s115, %s131
      %p133 = scmp.eq.s32.totalorder %s18, 0
      %p134 = por %p132, %p133
      %p135 = scmp.le.s32.totalorder 1, %s12
      %p136 = scmp.lt.s32.totalorder %s12, 3
      %p137 = pnand %p135, %p136
      %p138 = pneg %p137
      // Predicated region
      $region9: #{patch_embedding.1} parent=5 // pred_check
        _
      $region10: #{patch_embedding.1} parent=5 // pred_check_branch
        %140 = sbr.rel (%p137) target = $region12
      $region11: #{patch_embedding.1} parent=5 // pred_region
        %s141 = ssub.s32 %s12, 1
        // Predicated region
        $region13: #{patch_embedding.1} parent=11 // pred_check
          %p142 = pneg %p73
        $region14: #{patch_embedding.1} parent=11 // pred_check_branch
          %144 = sbr.rel (%p142) target = $region16
        $region15: #{patch_embedding.1} parent=11 // pred_region
          _
        $region16: #{patch_embedding.1} parent=11 // pred_fallthru
          _
        // Predicated region
        $region17: #{patch_embedding.1} parent=11 // pred_check
          %p145 = pneg %p99
        $region18: #{patch_embedding.1} parent=11 // pred_check_branch
          %147 = sbr.rel (%p145) target = $region20
        $region19: #{patch_embedding.1} parent=11 // pred_region
          %s148 = smul.u32 2, %s21
          %p149 = scmp.lt.s32.totalorder %s148, 1
          %s150 = scalar_select %p149, %s148, 1
          %s151 = smul.addr %s150, 8
          %s152 = scalar_lea.vmem %s2, %s151
          %s153 = smul.u32 2, %s21
        $region20: #{patch_embedding.1} parent=11 // pred_fallthru
          _
      $region12: #{patch_embedding.1} parent=5 // pred_fallthru
        _
      %p154 = scmp.lt.s32.totalorder %s12, 2
      // Predicated region
      $region21: #{patch_embedding.1} parent=5 // pred_check
        %p155 = pneg %p154
      $region22: #{patch_embedding.1} parent=5 // pred_check_branch
        %157 = sbr.rel (%p155) target = $region24
      $region23: #{patch_embedding.1} parent=5 // pred_region
        // Predicated region
        $region25: #{patch_embedding.1} parent=23 // pred_check
          %p158 = pneg %p46
        $region26: #{patch_embedding.1} parent=23 // pred_check_branch
          %160 = sbr.rel (%p158) target = $region28
        $region27: #{patch_embedding.1} parent=23 // pred_region
          %s161 = smul.u32 2, %s19
          %p162 = scmp.lt.s32.totalorder %s20, 1
          %s163 = scalar_select %p162, %s20, 1
          %p164 = scmp.lt.s32.totalorder %s161, 1
          %s165 = scalar_select %p164, %s161, 1
          %s166 = smul.addr %s163, 2
          %s167 = sadd.s32 %s165, %s166
          %s168 = smul.addr %s167, 8
          %s169 = scalar_lea.vmem %s0, %s168
          %s170 = smul.u32 2, %s19
        $region28: #{patch_embedding.1} parent=23 // pred_fallthru
          _
      $region24: #{patch_embedding.1} parent=5 // pred_fallthru
        _
      %p171 = scmp.le.s32.totalorder 1, %s12
      %p172 = scmp.lt.s32.totalorder %s12, 3
      %p173 = pnand %p171, %p172
      %p174 = pneg %p173
      // Predicated region
      $region29: #{patch_embedding.1} parent=5 // pred_check
        _
      $region30: #{patch_embedding.1} parent=5 // pred_check_branch
        %176 = sbr.rel (%p173) target = $region32
      $region31: #{patch_embedding.1} parent=5 // pred_region
        %s177 = ssub.s32 %s12, 1
        %s178 = smul.u32 2, %s21
        %p179 = scmp.lt.s32.totalorder %s22, 1
        %s180 = scalar_select %p179, %s22, 1
        %p181 = scmp.lt.s32.totalorder %s178, 1
        %s182 = scalar_select %p181, %s178, 1
        %s183 = smul.addr %s180, 2
        %s184 = sadd.s32 %s182, %s183
        %s185 = smul.addr %s184, 8
        %s186 = scalar_lea.vmem %s0, %s185
        %p187 = pneg %p52
        %p188 = pneg %p49
        %p189 = pneg %p73
        %p190 = pneg %p70
        %s191 = smul.u32 2, %s21
        %p192 = scmp.lt.s32.totalorder %s191, 1
        %s193 = scalar_select %p192, %s191, 1
        %s194 = smul.addr %s193, 8
        %s195 = scalar_lea.vmem %s2, %s194
        %p196 = pneg %p99
        %p197 = pneg %p96
        %p198 = pneg %p127
        %p199 = pneg %p124
        %s200 = sand.u32 %s114, 1
        %s201 = scalar_lea.sflag [#allocation3], %s200
        %s202 = sand.u32 %s114, 1
        %s203 = smul.addr %s202, 16
        %s204 = scalar_lea.vmem [#allocation2], %s203
        %s205 = smul.u32 2, %s21
        %p206 = scmp.lt.s32.totalorder %s22, 1
        %s207 = scalar_select %p206, %s22, 1
        %p208 = scmp.lt.s32.totalorder %s205, 1
        %s209 = scalar_select %p208, %s205, 1
        %s210 = smul.addr %s207, 2
        %s211 = sadd.s32 %s209, %s210
        %s212 = smul.addr %s211, 8
        %s213 = scalar_lea.vmem %s0, %s212
        %s214 = smul.u32 2, %s21
        %s215 = smul.u32 2, %s21
        %p216 = scmp.lt.s32.totalorder %s215, 1
        %s217 = scalar_select %p216, %s215, 1
        %s218 = smul.addr %s217, 8
        %s219 = scalar_lea.vmem %s2, %s218
        %s220 = smul.u32 2, %s21
        %s221 = smul.u32 2, %s21
        %v222 = vld [vmem:[%s213] sm:$0xff]
        %v223 = vld [vmem:[%s213 + $0x8] sm:$0xff]
        %v224 = vld [vmem:[%s1] sm:$0xff]
        %v225 = vld [vmem:[%s1 + $0x8] sm:$0xff]
        %v226 = vld [vmem:[%s1 + $0x10] sm:$0xff]
        %v227 = vld [vmem:[%s1 + $0x18] sm:$0xff]
        %v228 = vld [vmem:[%s1 + $0x20] sm:$0xff]
        %v229 = vld [vmem:[%s1 + $0x28] sm:$0xff]
        %v230 = vld [vmem:[%s1 + $0x30] sm:$0xff]
        %v231 = vld [vmem:[%s1 + $0x38] sm:$0xff]
        %v232 = vld [vmem:[%s219] sm:$0xff]
        %v233 = vld [vmem:[%s219 + $0x8] sm:$0xff]
        %vm234 = vcmask 523264
        %v236 = vsel %vm234, %v222, 0
        %v239 = vsel %vm234, %v223, 0
        %241 = vmatprep.subr.mxu0 0.0
        %242 = vmatpush1.msra.mxu0 %v224
        %243 = vmatprep.subr.mxu0 0.0
        %244 = vmatpush1.msra.mxu0 %v225
        %245 = vmatprep.subr.mxu0 0.0
        %246 = vmatpush1.msra.mxu0 %v226
        %247 = vmatprep.subr.mxu0 0.0
        %248 = vmatpush1.msra.mxu0 %v227
        %249 = vmatprep.subr.mxu0 0.0
        %250 = vmatpush1.msra.mxu0 %v228
        %251 = vmatprep.subr.mxu0 0.0
        %252 = vmatpush1.msra.mxu0 %v229
        %253 = vmatprep.subr.mxu0 0.0
        %254 = vmatpush1.msra.mxu0 %v230
        %255 = vmatprep.subr.mxu0 0.0
        %256 = vmatpush1.msra.mxu0 %v231
        %257 = vmatprep.subr.mxu0 0.0
        %258 = vmatpush1.msra.mxu0 0.0
        %259 = vmatprep.subr.mxu0 0.0
        %260 = vmatpush1.msra.mxu0 0.0
        %261 = vmatprep.subr.mxu0 0.0
        %262 = vmatpush1.msra.mxu0 0.0
        %263 = vmatprep.subr.mxu0 0.0
        %264 = vmatpush1.msra.mxu0 0.0
        %265 = vmatprep.subr.mxu0 0.0
        %266 = vmatpush1.msra.mxu0 0.0
        %267 = vmatprep.subr.mxu0 0.0
        %268 = vmatpush1.msra.mxu0 0.0
        %269 = vmatprep.subr.mxu0 0.0
        %270 = vmatpush1.msra.mxu0 0.0
        %271 = vmatprep.subr.mxu0 0.0
        %272 = vmatpush1.msra.mxu0 0.0
        %273 = vmatprep.subr.mxu0 0.0
        %274 = vmatpush1.msra.mxu0 0.0
        %275 = vmatprep.subr.mxu0 0.0
        %276 = vmatpush1.msra.mxu0 0.0
        %277 = vmatprep.subr.mxu0 0.0
        %278 = vmatpush1.msra.mxu0 0.0
        %279 = vmatprep.subr.mxu0 0.0
        %280 = vmatpush1.msra.mxu0 0.0
        %281 = vmatprep.subr.mxu0 0.0
        %282 = vmatpush1.msra.mxu0 0.0
        %283 = vmatprep.subr.mxu0 0.0
        %284 = vmatpush1.msra.mxu0 0.0
        %285 = vmatprep.subr.mxu0 0.0
        %286 = vmatpush1.msra.mxu0 0.0
        %287 = vmatprep.subr.mxu0 0.0
        %288 = vmatpush1.msra.mxu0 0.0
        %289 = vmatprep.subr.mxu0 0.0
        %290 = vmatpush1.msra.mxu0 0.0
        %291 = vmatprep.subr.mxu0 0.0
        %292 = vmatpush1.msra.mxu0 0.0
        %293 = vmatprep.subr.mxu0 0.0
        %294 = vmatpush1.msra.mxu0 0.0
        %295 = vmatprep.subr.mxu0 0.0
        %296 = vmatpush1.msra.mxu0 0.0
        %297 = vmatprep.subr.mxu0 0.0
        %298 = vmatpush1.msra.mxu0 0.0
        %299 = vmatprep.subr.mxu0 0.0
        %300 = vmatpush1.msra.mxu0 0.0
        %301 = vmatprep.subr.mxu0 0.0
        %302 = vmatpush1.msra.mxu0 0.0
        %303 = vmatprep.subr.mxu0 0.0
        %304 = vmatpush1.msra.mxu0 0.0
        %305 = vmatprep.mubr.f32.mxu0 0.0
        %306 = vmatmul.mubr.f32.gmra.mrb[0].mxu0 %v236
        %v307 = vpop.f32.mrb[0].mxu0
        %v308 = vadd.f32 %v232, %v307
        %v309 = vpop.f32.mrb[0].mxu0
        %310 = vmatprep.mubr.f32.mxu0 0.0
        %311 = vmatmul.mubr.f32.gmra.mrb[0].mxu0 %v239
        %v312 = vpop.f32.mrb[0].mxu0
        %v313 = vadd.f32 %v233, %v312
        %v314 = vpop.f32.mrb[0].mxu0
        %315 = vdwg.mxu0
        %vm316 = vcmask 261120
        %317 = vst.msk [vmem:[%s204] sm:$0xff] %vm316, %v308
        %318 = vst.msk [vmem:[%s204 + $0x8] sm:$0xff] %vm316, %v313
        %s319 = sand.u32 %s114, 1
        %s320 = scalar_lea.sflag [#allocation3], %s319
        %s321 = sand.u32 %s114, 1
        %s322 = smul.addr %s321, 16
        %s323 = scalar_lea.vmem [#allocation2], %s322
        // Predicated region
        $region33: #{patch_embedding.1} parent=31 // pred_check
          %p324 = pneg %p124
        $region34: #{patch_embedding.1} parent=31 // pred_check_branch
          %326 = sbr.rel (%p324) target = $region36
        $region35: #{patch_embedding.1} parent=31 // pred_region
          %s327 = smul.u32 2, %s21
          %s329 = ssub.s32 256, 256
          %330 = vsyncadd %s320, %s329
          %s331 = smul.addr %s22, 2
          %s332 = sadd.s32 %s327, %s331
          %s333 = smul.addr %s332, 128
          %s334 = scalar_lea.hbm %s3, %s333
          %s335 = sshll.u32 %s323, 4
          %s336 = int_to_ptr.vmem [resolvable:$true] %s335
          %341 = dma.vmem_to_hbm [thread:$0]  %s336, 256, %s334, %s320, 128, 128, 8
        $region36: #{patch_embedding.1} parent=31 // pred_fallthru
          _
      $region32: #{patch_embedding.1} parent=5 // pred_fallthru
        _
      %p342 = scmp.le.s32.totalorder 2, %s12
      // Predicated region
      $region37: #{patch_embedding.1} parent=5 // pred_check
        %p343 = pneg %p342
      $region38: #{patch_embedding.1} parent=5 // pred_check_branch
        %345 = sbr.rel (%p343) target = $region40
      $region39: #{patch_embedding.1} parent=5 // pred_region
        %s346 = ssub.s32 %s12, 2
        // Predicated region
        $region41: #{patch_embedding.1} parent=39 // pred_check
          %p347 = pneg %p130
        $region42: #{patch_embedding.1} parent=39 // pred_check_branch
          %349 = sbr.rel (%p347) target = $region44
        $region43: #{patch_embedding.1} parent=39 // pred_region
          %s350 = sand.u32 %s115, 1
          %s351 = scalar_lea.sflag [#allocation3], %s350
          %s352 = sand.u32 %s115, 1
          %s353 = smul.addr %s352, 16
          %s354 = scalar_lea.vmem [#allocation2], %s353
          %355 = dma.done %s351, 256
        $region44: #{patch_embedding.1} parent=39 // pred_fallthru
          _
      $region40: #{patch_embedding.1} parent=5 // pred_fallthru
        _
    $region6: #{patch_embedding.1} parent=1 // loop_footer
      %s16 = sadd.s32 1, %s12
    $region7: #{patch_embedding.1} parent=1 // loop_footer_branch
      %11 = sbr.rel target = $region3
    $region8: #{patch_embedding.1} parent=1 // loop_exit
      _
    %356 = vsyncpa [#allocation3], 1
    %s357 = scalar_lea.sflag [#allocation3], 1
    %358 = vsyncpa %s357, 1

</llo_original>
